<compile_context>
chip_gen: v7x
topology: tpu7x:2x2x1
jax: 0.10.0
libtpu: 0.0.40
codegen_flags: <defaults>
</compile_context>

<pallas_src>
import functools

import numpy as np
import jax
import jax.numpy as jnp
from jax.experimental import pallas as pl
from jax.experimental.pallas import tpu as pltpu


def _ce_kernel(x_ref, l_ref, loss_out_ref, npos_out_ref, loss_acc, npos_acc,
               *, S, n_chunks, chunk):
    # x_ref / l_ref   : (C, tile) VMEM blocks (logits / labels, native dtype)
    # loss_out_ref    : (1, C) partial sum of ce * label for this (n, g)
    # npos_out_ref    : (1, C) partial sum of label for this (n, g)
    # loss_acc/npos_acc: (C, chunk) f32 lane-dense accumulators (VMEM scratch)
    g = pl.program_id(1)
    k = pl.program_id(2)
    n_inner = pl.num_programs(2)
    C = loss_acc.shape[0]
    tile = n_chunks * chunk

    @pl.when(k == 0)
    def _init():
        loss_acc[...] = jnp.zeros_like(loss_acc)
        npos_acc[...] = jnp.zeros_like(npos_acc)

    # Logical (UNclamped) spatial block index -> first global lane of this step.
    # Duplicated blocks (clamped DMA at the tail of the last group) and the
    # ragged tail of the last real block are masked out below via `< S`.
    block_base = (g * n_inner + k) * tile

    cls = jax.lax.broadcasted_iota(jnp.int32, (C, chunk), 0)   # hoisted
    lane = jax.lax.broadcasted_iota(jnp.int32, (1, chunk), 1)  # hoisted

    @pl.loop(0, n_chunks)
    def _chunk(j):
        off = pl.multiple_of(j * chunk, chunk)
        x = x_ref[:, pl.ds(off, chunk)].astype(jnp.float32)    # (C, chunk)
        l = l_ref[:, pl.ds(off, chunk)].astype(jnp.float32)    # (C, chunk)

        # First-occurrence argmax of the label over the class (sublane) axis,
        # built from max/min reductions (matches torch argmax semantics).
        lmax = jnp.max(l, axis=0, keepdims=True)               # (1, chunk)
        am = jnp.min(jnp.where(l == lmax, cls, C), axis=0, keepdims=True)
        onehot = cls == am                                     # (C, chunk)

        # Numerically stable per-voxel cross-entropy:
        #   ce = logsumexp(x) - x[target]
        xmax = jnp.max(x, axis=0, keepdims=True)               # (1, chunk)
        xs = x - xmax
        lse = jnp.log(jnp.sum(jnp.exp(xs), axis=0, keepdims=True))
        tgt = jnp.sum(jnp.where(onehot, xs, 0.0), axis=0, keepdims=True)
        ce = lse - tgt                                         # (1, chunk)

        # Mask out-of-range lanes (ragged last block / duplicated clamped
        # block).  jnp.where (not multiply) so garbage NaN/Inf never leaks in.
        valid = (block_base + off + lane) < S                  # (1, chunk)
        loss_acc[...] += jnp.where(valid, ce * l, 0.0)
        npos_acc[...] += jnp.where(valid, l, 0.0)

    @pl.when(k == n_inner - 1)
    def _finalize():
        loss_out_ref[...] = jnp.sum(loss_acc[...], axis=1)[None, :]
        npos_out_ref[...] = jnp.sum(npos_acc[...], axis=1)[None, :]


def ce_loss(logit, label, *, chunk=1024, max_tile=65536,
            vmem_budget_bytes=24 * 1024 * 1024):
    """logit, label: (N, C, D, H, W), any float dtype -> (N,) float32 loss."""
    N, C = int(logit.shape[0]), int(logit.shape[1])
    S = int(np.prod(logit.shape[2:]))

    # Native dtype all the way to VMEM: no wrapper upcast, no HBM pad copy.
    x = logit.reshape(N, C, S)
    l = label.reshape(N, C, S)

    chunk = max(128, (int(chunk) // 128) * 128)
    if S <= chunk:
        # Single block covering the full (small) spatial extent.
        chunk = S
        tile = S
    else:
        # Tile from a VMEM budget: 2 inputs x 2 pipeline buffers, rows padded
        # to the 8-sublane granularity.  Budget is conservative for v7x 64 MiB.
        rows = max(8, -(-C // 8) * 8)
        per_lane = 2 * rows * (x.dtype.itemsize + l.dtype.itemsize)
        budget_tile = max(chunk,
                          (int(vmem_budget_bytes) // per_lane) // chunk * chunk)
        cap = max(chunk, (int(max_tile) // chunk) * chunk)
        fit = max(chunk, (S // chunk) * chunk)   # keeps block <= spatial dim
        tile = min(budget_tile, cap, fit)
    n_chunks = tile // chunk
    n_blocks = -(-S // tile)

    # 2-way spatial split when N == 1 so both v7x TensorCores stay busy.
    G = 2 if (N == 1 and n_blocks >= 2) else 1
    n_inner = -(-n_blocks // G)

    def in_idx(n, g, k):
        # Clamp so the DMA never reads a fully out-of-bounds block; the kernel
        # masks duplicated / padded lanes using the *unclamped* index.
        return (n, 0, jnp.minimum(g * n_inner + k, n_blocks - 1))

    kernel = functools.partial(_ce_kernel, S=S, n_chunks=n_chunks, chunk=chunk)

    loss_p, npos_p = pl.pallas_call(
        kernel,
        out_shape=(jax.ShapeDtypeStruct((N, G, C), jnp.float32),
                   jax.ShapeDtypeStruct((N, G, C), jnp.float32)),
        grid_spec=pltpu.PrefetchScalarGridSpec(
            num_scalar_prefetch=0,
            grid=(N, G, n_inner),
            in_specs=[
                pl.BlockSpec((None, C, tile), in_idx),
                pl.BlockSpec((None, C, tile), in_idx),
            ],
            out_specs=(
                pl.BlockSpec((None, 1, C), lambda n, g, k: (n, g, 0)),
                pl.BlockSpec((None, 1, C), lambda n, g, k: (n, g, 0)),
            ),
            scratch_shapes=[
                pltpu.VMEM((C, chunk), jnp.float32),
                pltpu.VMEM((C, chunk), jnp.float32),
            ],
        ),
        compiler_params=pltpu.CompilerParams(
            dimension_semantics=("parallel", "parallel", "arbitrary"),
            vmem_limit_bytes=48 * 1024 * 1024,
        ),
    )(x, l)

    # Tiny epilogue: merge spatial splits, divide, mean over classes.
    loss_c = loss_p.sum(axis=1)          # (N, C)
    npos_c = npos_p.sum(axis=1)          # (N, C)
    return (loss_c / (npos_c + 1.0)).mean(axis=1)


def _reference(logit, label):
    """Pure-JAX mirror of the PyTorch CELoss.forward."""
    N, C = logit.shape[0], logit.shape[1]
    x = logit.reshape(N, C, -1).astype(jnp.float32)   # (N, C, S)
    l = label.reshape(N, C, -1).astype(jnp.float32)   # (N, C, S)
    lm = jnp.argmax(l, axis=1)                        # (N, S)
    logp = jax.nn.log_softmax(x, axis=1)              # (N, C, S)
    ce = -jnp.take_along_axis(logp, lm[:, None, :], axis=1)[:, 0, :]  # (N, S)
    loss_c = (ce[:, None, :] * l).sum(axis=2)         # (N, C)
    npos_c = l.sum(axis=2)                            # (N, C)
    return (loss_c / (npos_c + 1.0)).mean(axis=1)


if __name__ == "__main__":
    key = jax.random.PRNGKey(0)
    ks = jax.random.split(key, 6)

    # Case 1: f32, S multiple of 128 (single block, single chunk).
    N, C, D, H, W = 2, 4, 4, 8, 8  # S = 256
    logit = jax.random.normal(ks[0], (N, C, D, H, W), dtype=jnp.float32)
    idx = jax.random.randint(ks[1], (N, D, H, W), 0, C)
    label = jnp.moveaxis(jax.nn.one_hot(idx, C, dtype=jnp.float32), -1, 1)
    out = jax.block_until_ready(ce_loss(logit, label))
    ref = _reference(logit, label)
    np.testing.assert_allclose(np.asarray(out), np.asarray(ref),
                               rtol=1e-5, atol=1e-5)

    # Case 2: bf16 inputs streamed in native dtype, ragged S < 128 (no pad).
    N2, C2, D2, H2, W2 = 2, 4, 3, 7, 5  # S = 105
    logit2 = jax.random.normal(ks[2], (N2, C2, D2, H2, W2), dtype=jnp.bfloat16)
    idx2 = jax.random.randint(ks[3], (N2, D2, H2, W2), 0, C2)
    label2 = jnp.moveaxis(jax.nn.one_hot(idx2, C2, dtype=jnp.bfloat16), -1, 1)
    out2 = jax.block_until_ready(ce_loss(logit2, label2))
    ref2 = _reference(logit2, label2)
    np.testing.assert_allclose(np.asarray(out2), np.asarray(ref2),
                               rtol=1e-4, atol=1e-4)

    # Case 3: N=1, odd C, multi-block ragged S with chunked compute, 2-way
    # spatial split and the clamped (duplicated-block) masking path.
    N3, C3, D3, H3, W3 = 1, 3, 5, 11, 13  # S = 715
    logit3 = jax.random.normal(ks[4], (N3, C3, D3, H3, W3), dtype=jnp.float32)
    idx3 = jax.random.randint(ks[5], (N3, D3, H3, W3), 0, C3)
    label3 = jnp.moveaxis(jax.nn.one_hot(idx3, C3, dtype=jnp.float32), -1, 1)
    out3 = jax.block_until_ready(ce_loss(logit3, label3, chunk=128, max_tile=256))
    ref3 = _reference(logit3, label3)
    np.testing.assert_allclose(np.asarray(out3), np.asarray(ref3),
                               rtol=1e-5, atol=1e-5)

    print("KERNEL_OK")
</pallas_src>

<mosaic_0001>
module attributes {stable_mosaic.version = 11 : i64} {
  func.func @_ce_kernel(%arg0: i32, %arg1: i32, %arg2: i32, %arg3: memref<1x4x256xf32, #tpu.memory_space<vmem>>, %arg4: memref<1x4x256xf32, #tpu.memory_space<vmem>>, %arg5: memref<1x1x4xf32, #tpu.memory_space<vmem>>, %arg6: memref<1x1x4xf32, #tpu.memory_space<vmem>>, %arg7: memref<4x256xf32, #tpu.memory_space<vmem>>, %arg8: memref<4x256xf32, #tpu.memory_space<vmem>>) attributes {dimension_semantics = [#tpu.dimension_semantics<parallel>, #tpu.dimension_semantics<parallel>, #tpu.dimension_semantics<arbitrary>], iteration_bounds = array<i64: 2, 1, 1>, scalar_prefetch = 0 : i64, scratch_operands = 2 : i64, tpu.core_type = #tpu.core_type<tc>, window_params = [{transform_indices = @transform_0, window_bounds = array<i64: 1, 4, 256>}, {transform_indices = @transform_1, window_bounds = array<i64: 1, 4, 256>}, {transform_indices = @transform_2, window_bounds = array<i64: 1, 1, 4>}, {transform_indices = @transform_3, window_bounds = array<i64: 1, 1, 4>}]} {
    %c0_i32 = arith.constant 0 : i32
    %0 = arith.cmpi eq, %arg2, %c0_i32 : i32
    %1 = arith.extui %0 : i1 to i32
    %c0_i32_0 = arith.constant 0 : i32
    %2 = arith.cmpi ne, %1, %c0_i32_0 : i32
    scf.if %2 {
      %cst_27 = arith.constant 0.000000e+00 : f32
      %65 = vector.broadcast %cst_27 : f32 to vector<4x256xf32>
      %c0_28 = arith.constant 0 : index
      %c0_29 = arith.constant 0 : index
      %66 = vector.load %arg7[%c0_28, %c0_29] : memref<4x256xf32, #tpu.memory_space<vmem>>, vector<4x256xf32>
      tpu.vector_store %arg7[%c0_28, %c0_29], %65 {strides = array<i32>} : memref<4x256xf32, #tpu.memory_space<vmem>>, vector<4x256xf32>,
      %cst_30 = arith.constant 0.000000e+00 : f32
      %67 = vector.broadcast %cst_30 : f32 to vector<4x256xf32>
      %c0_31 = arith.constant 0 : index
      %c0_32 = arith.constant 0 : index
      %68 = vector.load %arg8[%c0_31, %c0_32] : memref<4x256xf32, #tpu.memory_space<vmem>>, vector<4x256xf32>
      tpu.vector_store %arg8[%c0_31, %c0_32], %67 {strides = array<i32>} : memref<4x256xf32, #tpu.memory_space<vmem>>, vector<4x256xf32>,
    } else {
    }
    %c1_i32 = arith.constant 1 : i32
    %3 = arith.muli %arg1, %c1_i32 : i32
    %4 = arith.addi %3, %arg2 : i32
    %c256_i32 = arith.constant 256 : i32
    %5 = arith.muli %4, %c256_i32 : i32
    %6 = tpu.iota {dimensions = array<i32: 0>} : vector<4x256xi32>
    %7 = tpu.iota {dimensions = array<i32: 1>} : vector<1x256xi32>
    %c0_i32_1 = arith.constant 0 : i32
    %c1_i32_2 = arith.constant 1 : i32
    %8 = arith.muli %c0_i32_1, %c1_i32_2 : i32
    %c0_i32_3 = arith.constant 0 : i32
    %9 = arith.addi %c0_i32_3, %8 : i32
    %c256_i32_4 = arith.constant 256 : i32
    %10 = arith.muli %9, %c256_i32_4 : i32
    %11 = tpu.assume_multiple %10, 256 : i32
    %c0 = arith.constant 0 : index
    %c0_5 = arith.constant 0 : index
    %12 = arith.index_cast %11 : i32 to index
    %13 = vector.load %arg3[%c0, %c0_5, %12] : memref<1x4x256xf32, #tpu.memory_space<vmem>>, vector<1x4x256xf32>
    %14 = vector.shape_cast %13 : vector<1x4x256xf32> to vector<4x256xf32>
    %c0_6 = arith.constant 0 : index
    %c0_7 = arith.constant 0 : index
    %15 = arith.index_cast %11 : i32 to index
    %16 = vector.load %arg4[%c0_6, %c0_7, %15] : memref<1x4x256xf32, #tpu.memory_space<vmem>>, vector<1x4x256xf32>
    %17 = vector.shape_cast %16 : vector<1x4x256xf32> to vector<4x256xf32>
    %cst = arith.constant dense<0xFF800000> : vector<256xf32>
    %18 = vector.multi_reduction <maximumf>, %17, %cst [0] : vector<4x256xf32> to vector<256xf32>
    %19 = vector.shape_cast %18 : vector<256xf32> to vector<1x256xf32>
    %20 = vector.broadcast %19 : vector<1x256xf32> to vector<4x256xf32>
    %21 = arith.cmpf oeq, %17, %20 : vector<4x256xf32>
    %c4_i32 = arith.constant 4 : i32
    %22 = vector.broadcast %c4_i32 : i32 to vector<4x256xi32>
    %23 = arith.select %21, %6, %22 : vector<4x256xi1>, vector<4x256xi32>
    %cst_8 = arith.constant dense<2147483647> : vector<256xi32>
    %24 = vector.multi_reduction <minsi>, %23, %cst_8 [0] : vector<4x256xi32> to vector<256xi32>
    %25 = vector.shape_cast %24 : vector<256xi32> to vector<1x256xi32>
    %26 = vector.broadcast %25 : vector<1x256xi32> to vector<4x256xi32>
    %27 = arith.cmpi eq, %6, %26 : vector<4x256xi32>
    %cst_9 = arith.constant dense<0xFF800000> : vector<256xf32>
    %28 = vector.multi_reduction <maximumf>, %14, %cst_9 [0] : vector<4x256xf32> to vector<256xf32>
    %29 = vector.shape_cast %28 : vector<256xf32> to vector<1x256xf32>
    %30 = vector.broadcast %29 : vector<1x256xf32> to vector<4x256xf32>
    %31 = arith.subf %14, %30 : vector<4x256xf32>
    %32 = math.exp %31 : vector<4x256xf32>
    %cst_10 = arith.constant dense<0.000000e+00> : vector<256xf32>
    %33 = vector.multi_reduction <add>, %32, %cst_10 [0] : vector<4x256xf32> to vector<256xf32>
    %34 = vector.shape_cast %33 : vector<256xf32> to vector<1x256xf32>
    %35 = math.log %34 : vector<1x256xf32>
    %cst_11 = arith.constant 0.000000e+00 : f32
    %36 = vector.broadcast %cst_11 : f32 to vector<4x256xf32>
    %37 = arith.select %27, %31, %36 : vector<4x256xi1>, vector<4x256xf32>
    %cst_12 = arith.constant dense<0.000000e+00> : vector<256xf32>
    %38 = vector.multi_reduction <add>, %37, %cst_12 [0] : vector<4x256xf32> to vector<256xf32>
    %39 = vector.shape_cast %38 : vector<256xf32> to vector<1x256xf32>
    %40 = arith.subf %35, %39 : vector<1x256xf32>
    %41 = arith.addi %5, %11 : i32
    %42 = vector.broadcast %41 : i32 to vector<1x256xi32>
    %43 = arith.addi %42, %7 : vector<1x256xi32>
    %c256_i32_13 = arith.constant 256 : i32
    %44 = vector.broadcast %c256_i32_13 : i32 to vector<1x256xi32>
    %45 = arith.cmpi slt, %43, %44 : vector<1x256xi32>
    %c0_14 = arith.constant 0 : index
    %c0_15 = arith.constant 0 : index
    %46 = vector.load %arg7[%c0_14, %c0_15] : memref<4x256xf32, #tpu.memory_space<vmem>>, vector<4x256xf32>
    %47 = vector.broadcast %40 : vector<1x256xf32> to vector<4x256xf32>
    %48 = arith.mulf %47, %17 : vector<4x256xf32>
    %cst_16 = arith.constant 0.000000e+00 : f32
    %49 = vector.shape_cast %45 : vector<1x256xi1> to vector<1x256xi1>
    %50 = vector.broadcast %49 : vector<1x256xi1> to vector<4x256xi1>
    %51 = vector.broadcast %cst_16 : f32 to vector<4x256xf32>
    %52 = arith.select %50, %48, %51 : vector<4x256xi1>, vector<4x256xf32>
    %53 = arith.addf %46, %52 : vector<4x256xf32>
    %c0_17 = arith.constant 0 : index
    %c0_18 = arith.constant 0 : index
    %54 = vector.load %arg7[%c0_17, %c0_18] : memref<4x256xf32, #tpu.memory_space<vmem>>, vector<4x256xf32>
    tpu.vector_store %arg7[%c0_17, %c0_18], %53 {strides = array<i32>} : memref<4x256xf32, #tpu.memory_space<vmem>>, vector<4x256xf32>,
    %c0_19 = arith.constant 0 : index
    %c0_20 = arith.constant 0 : index
    %55 = vector.load %arg8[%c0_19, %c0_20] : memref<4x256xf32, #tpu.memory_space<vmem>>, vector<4x256xf32>
    %cst_21 = arith.constant 0.000000e+00 : f32
    %56 = vector.shape_cast %45 : vector<1x256xi1> to vector<1x256xi1>
    %57 = vector.broadcast %56 : vector<1x256xi1> to vector<4x256xi1>
    %58 = vector.broadcast %cst_21 : f32 to vector<4x256xf32>
    %59 = arith.select %57, %17, %58 : vector<4x256xi1>, vector<4x256xf32>
    %60 = arith.addf %55, %59 : vector<4x256xf32>
    %c0_22 = arith.constant 0 : index
    %c0_23 = arith.constant 0 : index
    %61 = vector.load %arg8[%c0_22, %c0_23] : memref<4x256xf32, #tpu.memory_space<vmem>>, vector<4x256xf32>
    tpu.vector_store %arg8[%c0_22, %c0_23], %60 {strides = array<i32>} : memref<4x256xf32, #tpu.memory_space<vmem>>, vector<4x256xf32>,
    %c1_i32_24 = arith.constant 1 : i32
    %c0_i32_25 = arith.constant 0 : i32
    %62 = arith.cmpi eq, %arg2, %c0_i32_25 : i32
    %63 = arith.extui %62 : i1 to i32
    %c0_i32_26 = arith.constant 0 : i32
    %64 = arith.cmpi ne, %63, %c0_i32_26 : i32
    scf.if %64 {
      %c0_27 = arith.constant 0 : index
      %c0_28 = arith.constant 0 : index
      %65 = vector.load %arg7[%c0_27, %c0_28] : memref<4x256xf32, #tpu.memory_space<vmem>>, vector<4x256xf32>
      %cst_29 = arith.constant dense<0.000000e+00> : vector<4xf32>
      %66 = vector.multi_reduction <add>, %65, %cst_29 [1] : vector<4x256xf32> to vector<4xf32>
      %67 = vector.shape_cast %66 : vector<4xf32> to vector<1x4xf32>
      %c0_30 = arith.constant 0 : index
      %c0_31 = arith.constant 0 : index
      %c0_32 = arith.constant 0 : index
      %68 = vector.load %arg5[%c0_30, %c0_31, %c0_32] : memref<1x1x4xf32, #tpu.memory_space<vmem>>, vector<1x1x4xf32>
      %69 = vector.shape_cast %68 : vector<1x1x4xf32> to vector<1x4xf32>
      %70 = vector.shape_cast %67 : vector<1x4xf32> to vector<1x1x4xf32>
      tpu.vector_store %arg5[%c0_30, %c0_31, %c0_32], %70 {strides = array<i32>} : memref<1x1x4xf32, #tpu.memory_space<vmem>>, vector<1x1x4xf32>,
      %c0_33 = arith.constant 0 : index
      %c0_34 = arith.constant 0 : index
      %71 = vector.load %arg8[%c0_33, %c0_34] : memref<4x256xf32, #tpu.memory_space<vmem>>, vector<4x256xf32>
      %cst_35 = arith.constant dense<0.000000e+00> : vector<4xf32>
      %72 = vector.multi_reduction <add>, %71, %cst_35 [1] : vector<4x256xf32> to vector<4xf32>
      %73 = vector.shape_cast %72 : vector<4xf32> to vector<1x4xf32>
      %c0_36 = arith.constant 0 : index
      %c0_37 = arith.constant 0 : index
      %c0_38 = arith.constant 0 : index
      %74 = vector.load %arg6[%c0_36, %c0_37, %c0_38] : memref<1x1x4xf32, #tpu.memory_space<vmem>>, vector<1x1x4xf32>
      %75 = vector.shape_cast %74 : vector<1x1x4xf32> to vector<1x4xf32>
      %76 = vector.shape_cast %73 : vector<1x4xf32> to vector<1x1x4xf32>
      tpu.vector_store %arg6[%c0_36, %c0_37, %c0_38], %76 {strides = array<i32>} : memref<1x1x4xf32, #tpu.memory_space<vmem>>, vector<1x1x4xf32>,
    } else {
    }
    return
  }
  func.func @transform_0(%arg0: i32, %arg1: i32, %arg2: i32) -> (i32, i32, i32) {
    %c1_i32 = arith.constant 1 : i32
    %0 = arith.muli %arg1, %c1_i32 : i32
    %1 = arith.addi %0, %arg2 : i32
    %c0_i32 = arith.constant 0 : i32
    %2 = arith.minsi %1, %c0_i32 : i32
    %c0_i32_0 = arith.constant 0 : i32
    %c0_i32_1 = arith.constant 0 : i32
    return %arg0, %c0_i32_0, %2 : i32, i32, i32
  }
  func.func @transform_1(%arg0: i32, %arg1: i32, %arg2: i32) -> (i32, i32, i32) {
    %c1_i32 = arith.constant 1 : i32
    %0 = arith.muli %arg1, %c1_i32 : i32
    %1 = arith.addi %0, %arg2 : i32
    %c0_i32 = arith.constant 0 : i32
    %2 = arith.minsi %1, %c0_i32 : i32
    %c0_i32_0 = arith.constant 0 : i32
    %c0_i32_1 = arith.constant 0 : i32
    return %arg0, %c0_i32_0, %2 : i32, i32, i32
  }
  func.func @transform_2(%arg0: i32, %arg1: i32, %arg2: i32) -> (i32, i32, i32) {
    %c0_i32 = arith.constant 0 : i32
    %c0_i32_0 = arith.constant 0 : i32
    return %arg0, %arg1, %c0_i32 : i32, i32, i32
  }
  func.func @transform_3(%arg0: i32, %arg1: i32, %arg2: i32) -> (i32, i32, i32) {
    %c0_i32 = arith.constant 0 : i32
    %c0_i32_0 = arith.constant 0 : i32
    return %arg0, %arg1, %c0_i32 : i32, i32, i32
  }
}

</mosaic_0001>

<llo_original>
// kernel: tpu_custom_call.1
$region0: #{tpu_custom_call.1}
  #allocation0 [shape = 'u32[]', space=smem, size = 0x4, offset = 0x4, fixed_abs, tag = 'smem constant byte address 0x4 - core index']
  #allocation1 [shape = 'u32[144,128]{1,0:T(1,128)}', space=vmem, size = 0x12000, scoped, tag = 'internal scratch']
  #allocation2 [shape = 'f32[4,256]{1,0:T(4,128)}', space=vmem, size = 0x1000, scoped, tag = 'scratch operand']
  #allocation3 [shape = 'f32[4,256]{1,0:T(4,128)}', space=vmem, size = 0x1000, scoped, tag = 'scratch operand']
  %s0 = inlined_call_operand.hbm [shape: f32[2,4,256], index: 0, kind: input, shape index: {}]
  %s1 = inlined_call_operand.hbm [shape: f32[2,4,256], index: 1, kind: input, shape index: {}]
  %s2 = inlined_call_operand.hbm [shape: f32[2,1,4], index: 2, kind: output, shape index: {0}]
  %s3 = inlined_call_operand.hbm [shape: f32[2,1,4], index: 3, kind: output, shape index: {1}]
  %4 = xla_tuple %s2, %s3
  %s5 = sld [smem:[#allocation0]]
  $region65: #{tpu_custom_call.1} parent=0
    _
  %s7 = ssub.s32 1, %s5
  %s8 = scalar_select 0, %s7, %s5
  $region1: #{tpu_custom_call.1} parent=0
    #allocation4 [shape = 'u8[8192]{0}', space=vmem, size = 0x2000, scoped, tag = 'input window, operand 0']
    #allocation5 [shape = 's32[2]{0}', space=sflag, size = 0x8, scoped, tag = 'scoped memory for tpu_custom_call.1']
    #allocation6 [shape = 's32[2]{0}', space=sflag, size = 0x8, scoped, tag = 'scoped memory for tpu_custom_call.1']
    #allocation7 [shape = 'u8[8192]{0}', space=vmem, size = 0x2000, scoped, tag = 'input window, operand 1']
    #allocation8 [shape = 's32[2]{0}', space=sflag, size = 0x8, scoped, tag = 'scoped memory for tpu_custom_call.1']
    #allocation9 [shape = 'u8[1024]{0}', space=vmem, size = 0x400, scoped, tag = 'output window, operand 0']
    #allocation10 [shape = 'u8[1024]{0}', space=vmem, size = 0x400, scoped, tag = 'output window, operand 1']
    #allocation11 [shape = 's32[2]{0}', space=sflag, size = 0x8, scoped, tag = 'scoped memory for tpu_custom_call.1']
    %9 = vsyncpa [#allocation5], 0
    %s10 = scalar_lea.sflag [#allocation5], 1
    %11 = vsyncpa %s10, 0
    %12 = vsyncpa [#allocation8], 0
    %s13 = scalar_lea.sflag [#allocation8], 1
    %14 = vsyncpa %s13, 0
    %15 = vsyncpa [#allocation6], 0
    %s16 = scalar_lea.sflag [#allocation6], 1
    %17 = vsyncpa %s16, 0
    %18 = vsyncpa [#allocation11], 0
    %s19 = scalar_lea.sflag [#allocation11], 1
    %20 = vsyncpa %s19, 0
    loop: start=0, step=1, limit=4
    $region2: #{tpu_custom_call.1} parent=1 // loop_pre_header
      _
    $region3: #{tpu_custom_call.1} parent=1 // loop_header
      %s22 = sphi 0, %s26
      %p23 = scmp.ge.s32.totalorder %s22, 4
      %s29 = sphi 0, %s48
      %s30 = sphi 0, %s44
      %s31 = sphi 0, %s40
      %s32 = sphi 0, %s29
      %s33 = sphi 0, %s30
      %s34 = sphi 0, %s31
      %s35 = sphi 0, %s32
      %s36 = sphi 0, %s33
      %s37 = sphi 0, %s34
      %s59 = sphi 0, %s61
      %s62 = sphi 0, %s59
      %s63 = sphi 0, %s62
      %s79 = sphi 0, %s63
      %s93 = sphi 0, %s95
      %s96 = sphi 0, %s93
      %s97 = sphi 0, %s96
      %s113 = sphi 0, %s97
      %s121 = sphi 0, %s123
      %s124 = sphi 0, %s121
      %s125 = sphi 0, %s124
      %s141 = sphi 0, %s125
      %s149 = sphi 0, %s151
      %s152 = sphi 0, %s149
      %s153 = sphi 0, %s152
      %s169 = sphi 0, %s153
    $region4: #{tpu_custom_call.1} parent=1 // loop_header_branch
      %25 = sbr.rel (%p23) target = $region8
    $region5: #{tpu_custom_call.1} parent=1 // loop_body
      %s27 = ssub.s32 %s22, 1
      %s28 = ssub.s32 %s22, 2
      %s38 = sadd.s32 1, %s31
      %p39 = scmp.ge.s32.totalorder %s38, 1
      %s40 = scalar_select %p39, 0, %s38
      %s41 = sadd.s32 1, %s30
      %s42 = scalar_select %p39, %s41, %s30
      %p43 = scmp.ge.s32.totalorder %s42, 1
      %s44 = scalar_select %p43, 0, %s42
      %s45 = sadd.s32 1, %s29
      %s46 = scalar_select %p43, %s45, %s29
      %p47 = scmp.ge.s32.totalorder %s46, 2
      %s48 = scalar_select %p47, 0, %s46
      %s49 = sadd.s32 %s30, %s31
      %p50 = scmp.lt.s32.totalorder %s49, 0
      %s51 = scalar_select %p50, %s49, 0
      %s52 = sadd.s32 %s44, %s40
      %p53 = scmp.lt.s32.totalorder %s52, 0
      %s54 = scalar_select %p53, %s52, 0
      %s55 = ssub.s32 %s29, %s48
      %s56 = ssub.s32 %s51, %s54
      %s57 = sor.u32 %s55, %s56
      %p58 = scmp.eq.s32.totalorder %s57, 0
      %s60 = sadd.s32 %s59, 1
      %s61 = scalar_select %p58, %s59, %s60
      %p64 = pneg %p58
      %p65 = scmp.eq.s32.totalorder %s22, 1
      %p66 = por %p64, %p65
      %p67 = scmp.ne.s32.totalorder %s59, %s62
      %p68 = scmp.eq.s32.totalorder %s22, 0
      %p69 = por %p67, %p68
      %p70 = scmp.ne.s32.totalorder %s59, %s62
      %p71 = scmp.eq.s32.totalorder %s27, 1
      %p72 = por %p70, %p71
      %p73 = scmp.ne.s32.totalorder %s62, %s63
      %p74 = scmp.eq.s32.totalorder %s27, 0
      %p75 = por %p73, %p74
      %p76 = scmp.ne.s32.totalorder %s62, %s63
      %p77 = scmp.eq.s32.totalorder %s28, 1
      %p78 = por %p76, %p77
      %p80 = scmp.ne.s32.totalorder %s63, %s79
      %p81 = scmp.eq.s32.totalorder %s28, 0
      %p82 = por %p80, %p81
      %s83 = sadd.s32 %s30, %s31
      %p84 = scmp.lt.s32.totalorder %s83, 0
      %s85 = scalar_select %p84, %s83, 0
      %s86 = sadd.s32 %s44, %s40
      %p87 = scmp.lt.s32.totalorder %s86, 0
      %s88 = scalar_select %p87, %s86, 0
      %s89 = ssub.s32 %s29, %s48
      %s90 = ssub.s32 %s85, %s88
      %s91 = sor.u32 %s89, %s90
      %p92 = scmp.eq.s32.totalorder %s91, 0
      %s94 = sadd.s32 %s93, 1
      %s95 = scalar_select %p92, %s93, %s94
      %p98 = pneg %p92
      %p99 = scmp.eq.s32.totalorder %s22, 1
      %p100 = por %p98, %p99
      %p101 = scmp.ne.s32.totalorder %s93, %s96
      %p102 = scmp.eq.s32.totalorder %s22, 0
      %p103 = por %p101, %p102
      %p104 = scmp.ne.s32.totalorder %s93, %s96
      %p105 = scmp.eq.s32.totalorder %s27, 1
      %p106 = por %p104, %p105
      %p107 = scmp.ne.s32.totalorder %s96, %s97
      %p108 = scmp.eq.s32.totalorder %s27, 0
      %p109 = por %p107, %p108
      %p110 = scmp.ne.s32.totalorder %s96, %s97
      %p111 = scmp.eq.s32.totalorder %s28, 1
      %p112 = por %p110, %p111
      %p114 = scmp.ne.s32.totalorder %s97, %s113
      %p115 = scmp.eq.s32.totalorder %s28, 0
      %p116 = por %p114, %p115
      %s117 = ssub.s32 %s29, %s48
      %s118 = ssub.s32 %s30, %s44
      %s119 = sor.u32 %s117, %s118
      %p120 = scmp.eq.s32.totalorder %s119, 0
      %s122 = sadd.s32 %s121, 1
      %s123 = scalar_select %p120, %s121, %s122
      %p126 = pneg %p120
      %p127 = scmp.eq.s32.totalorder %s22, 1
      %p128 = por %p126, %p127
      %p129 = scmp.ne.s32.totalorder %s121, %s124
      %p130 = scmp.eq.s32.totalorder %s22, 0
      %p131 = por %p129, %p130
      %p132 = scmp.ne.s32.totalorder %s121, %s124
      %p133 = scmp.eq.s32.totalorder %s27, 1
      %p134 = por %p132, %p133
      %p135 = scmp.ne.s32.totalorder %s124, %s125
      %p136 = scmp.eq.s32.totalorder %s27, 0
      %p137 = por %p135, %p136
      %p138 = scmp.ne.s32.totalorder %s124, %s125
      %p139 = scmp.eq.s32.totalorder %s28, 1
      %p140 = por %p138, %p139
      %p142 = scmp.ne.s32.totalorder %s125, %s141
      %p143 = scmp.eq.s32.totalorder %s28, 0
      %p144 = por %p142, %p143
      %s145 = ssub.s32 %s29, %s48
      %s146 = ssub.s32 %s30, %s44
      %s147 = sor.u32 %s145, %s146
      %p148 = scmp.eq.s32.totalorder %s147, 0
      %s150 = sadd.s32 %s149, 1
      %s151 = scalar_select %p148, %s149, %s150
      %p154 = pneg %p148
      %p155 = scmp.eq.s32.totalorder %s22, 1
      %p156 = por %p154, %p155
      %p157 = scmp.ne.s32.totalorder %s149, %s152
      %p158 = scmp.eq.s32.totalorder %s22, 0
      %p159 = por %p157, %p158
      %p160 = scmp.ne.s32.totalorder %s149, %s152
      %p161 = scmp.eq.s32.totalorder %s27, 1
      %p162 = por %p160, %p161
      %p163 = scmp.ne.s32.totalorder %s152, %s153
      %p164 = scmp.eq.s32.totalorder %s27, 0
      %p165 = por %p163, %p164
      %p166 = scmp.ne.s32.totalorder %s152, %s153
      %p167 = scmp.eq.s32.totalorder %s28, 1
      %p168 = por %p166, %p167
      %p170 = scmp.ne.s32.totalorder %s153, %s169
      %p171 = scmp.eq.s32.totalorder %s28, 0
      %p172 = por %p170, %p171
      %p173 = scmp.le.s32.totalorder 1, %s22
      %p174 = scmp.lt.s32.totalorder %s22, 3
      %p175 = pnand %p173, %p174
      %p176 = pneg %p175
      // Predicated region
      $region9: #{tpu_custom_call.1} parent=5 // pred_check
        _
      $region10: #{tpu_custom_call.1} parent=5 // pred_check_branch
        %178 = sbr.rel (%p175) target = $region12
      $region11: #{tpu_custom_call.1} parent=5 // pred_region
        %s179 = ssub.s32 %s22, 1
      $region12: #{tpu_custom_call.1} parent=5 // pred_fallthru
        _
      %p180 = scmp.lt.s32.totalorder %s22, 2
      // Predicated region
      $region13: #{tpu_custom_call.1} parent=5 // pred_check
        %p181 = pneg %p180
      $region14: #{tpu_custom_call.1} parent=5 // pred_check_branch
        %183 = sbr.rel (%p181) target = $region16
      $region15: #{tpu_custom_call.1} parent=5 // pred_region
        // Predicated region
        $region17: #{tpu_custom_call.1} parent=15 // pred_check
          %p184 = pneg %p69
        $region18: #{tpu_custom_call.1} parent=15 // pred_check_branch
          %186 = sbr.rel (%p184) target = $region20
        $region19: #{tpu_custom_call.1} parent=15 // pred_region
          %s187 = sand.u32 %s59, 1
          %s188 = scalar_lea.sflag [#allocation5], %s187
          %s189 = sand.u32 %s59, 1
          %s190 = smul.addr %s189, 8
          %s191 = scalar_lea.vmem [#allocation4], %s190
          %s192 = sadd.s32 %s30, %s31
          %p193 = scmp.lt.s32.totalorder %s192, 0
          %s194 = scalar_select %p193, %s192, 0
          %s195 = smul.u32 2, %s194
          %s197 = ssub.s32 128, 128
          %198 = vsyncadd %s188, %s197
          %s199 = smul.addr %s29, 2
          %s200 = sadd.s32 %s195, %s199
          %s201 = smul.addr %s200, 64
          %s202 = scalar_lea.hbm %s0, %s201
          %s204 = sshll.u32 %s191, 4
          %s205 = int_to_ptr.vmem [resolvable:$true] %s204
          %207 = dma.hbm_to_vmem [thread:$0]  %s202, 128, %s205, %s188
        $region20: #{tpu_custom_call.1} parent=15 // pred_fallthru
          _
        // Predicated region
        $region21: #{tpu_custom_call.1} parent=15 // pred_check
          %p208 = pneg %p103
        $region22: #{tpu_custom_call.1} parent=15 // pred_check_branch
          %210 = sbr.rel (%p208) target = $region24
        $region23: #{tpu_custom_call.1} parent=15 // pred_region
          %s211 = sand.u32 %s93, 1
          %s212 = scalar_lea.sflag [#allocation8], %s211
          %s213 = sand.u32 %s93, 1
          %s214 = smul.addr %s213, 8
          %s215 = scalar_lea.vmem [#allocation7], %s214
          %s216 = sadd.s32 %s30, %s31
          %p217 = scmp.lt.s32.totalorder %s216, 0
          %s218 = scalar_select %p217, %s216, 0
          %s219 = smul.u32 2, %s218
          %s221 = ssub.s32 128, 128
          %222 = vsyncadd %s212, %s221
          %s223 = smul.addr %s29, 2
          %s224 = sadd.s32 %s219, %s223
          %s225 = smul.addr %s224, 64
          %s226 = scalar_lea.hbm %s1, %s225
          %s228 = sshll.u32 %s215, 4
          %s229 = int_to_ptr.vmem [resolvable:$true] %s228
          %231 = dma.hbm_to_vmem [thread:$0]  %s226, 128, %s229, %s212
        $region24: #{tpu_custom_call.1} parent=15 // pred_fallthru
          _
      $region16: #{tpu_custom_call.1} parent=5 // pred_fallthru
        _
      %p232 = scmp.le.s32.totalorder 1, %s22
      %p233 = scmp.lt.s32.totalorder %s22, 3
      %p234 = pnand %p232, %p233
      %p235 = pneg %p234
      // Predicated region
      $region25: #{tpu_custom_call.1} parent=5 // pred_check
        _
      $region26: #{tpu_custom_call.1} parent=5 // pred_check_branch
        %237 = sbr.rel (%p234) target = $region28
      $region27: #{tpu_custom_call.1} parent=5 // pred_region
        %s238 = ssub.s32 %s22, 1
        %s239 = sand.u32 %s62, 1
        %s240 = scalar_lea.sflag [#allocation5], %s239
        %s241 = sand.u32 %s62, 1
        %s242 = smul.addr %s241, 8
        %s243 = scalar_lea.vmem [#allocation4], %s242
        // Predicated region
        $region29: #{tpu_custom_call.1} parent=27 // pred_check
          %p244 = pneg %p75
        $region30: #{tpu_custom_call.1} parent=27 // pred_check_branch
          %246 = sbr.rel (%p244) target = $region32
        $region31: #{tpu_custom_call.1} parent=27 // pred_region
          %247 = dma.done %s240, 128
        $region32: #{tpu_custom_call.1} parent=27 // pred_fallthru
          _
        %s248 = sand.u32 %s96, 1
        %s249 = scalar_lea.sflag [#allocation8], %s248
        %s250 = sand.u32 %s96, 1
        %s251 = smul.addr %s250, 8
        %s252 = scalar_lea.vmem [#allocation7], %s251
        // Predicated region
        $region33: #{tpu_custom_call.1} parent=27 // pred_check
          %p253 = pneg %p109
        $region34: #{tpu_custom_call.1} parent=27 // pred_check_branch
          %255 = sbr.rel (%p253) target = $region36
        $region35: #{tpu_custom_call.1} parent=27 // pred_region
          %256 = dma.done %s249, 128
        $region36: #{tpu_custom_call.1} parent=27 // pred_fallthru
          _
        %s257 = sand.u32 %s62, 1
        %s258 = scalar_lea.sflag [#allocation5], %s257
        %s259 = sand.u32 %s62, 1
        %s260 = smul.addr %s259, 8
        %s261 = scalar_lea.vmem [#allocation4], %s260
        %p262 = pneg %p75
        %p263 = pneg %p72
        %s264 = sand.u32 %s96, 1
        %s265 = scalar_lea.sflag [#allocation8], %s264
        %s266 = sand.u32 %s96, 1
        %s267 = smul.addr %s266, 8
        %s268 = scalar_lea.vmem [#allocation7], %s267
        %p269 = pneg %p109
        %p270 = pneg %p106
        %p271 = pneg %p137
        %p272 = pneg %p134
        %s273 = sand.u32 %s124, 1
        %s274 = scalar_lea.sflag [#allocation6], %s273
        %s275 = sand.u32 %s124, 1
        %s276 = scalar_lea.vmem [#allocation9], %s275
        %p277 = pneg %p165
        %p278 = pneg %p162
        %s279 = sand.u32 %s152, 1
        %s280 = scalar_lea.sflag [#allocation11], %s279
        %s281 = sand.u32 %s152, 1
        %s282 = scalar_lea.vmem [#allocation10], %s281
        %s283 = sadd.s32 %s33, %s34
        %p284 = scmp.lt.s32.totalorder %s283, 0
        %s285 = scalar_select %p284, %s283, 0
        %s286 = smul.u32 2, %s285
        %s287 = sadd.s32 %s33, %s34
        %p288 = scmp.lt.s32.totalorder %s287, 0
        %s289 = scalar_select %p288, %s287, 0
        %s290 = smul.u32 2, %s289
        %p291 = scmp.eq.s32.totalorder %s34, 0
        // Predicated region
        $region37: #{tpu_custom_call.1} parent=27 // pred_check
          %p292 = pneg %p291
        $region38: #{tpu_custom_call.1} parent=27 // pred_check_branch
          %294 = sbr.rel (%p292) target = $region40
        $region39: #{tpu_custom_call.1} parent=27 // pred_region
          %295 = vst [vmem:[#allocation2] sm:$0xff] 0.0
          %296 = vst [vmem:[#allocation3] sm:$0xff] 0.0
        $region40: #{tpu_custom_call.1} parent=27 // pred_fallthru
          _
        %s297 = sadd.s32 %s33, %s34
        %s298 = smul.u32 %s297, 256
        %v299 = vlaneseq
        %v300 = vshrl.u32 %v299, 7
        %v301 = vlaneseq
        %v302 = vand.u32 %v301, 127
        %v303 = vadd.s32 %v302, 128
        %v304 = vld [vmem:[%s243] sm:$0xff]
        %v305 = vld [vmem:[%s252] sm:$0xff]
        %v307 = vcombine.high %v305, %v305
        %vm309 = vcmask 1043456
        %v310 = vsel %vm309, %v305, -inf
        %v311 = vrot.slane %v310, 4
        %v312 = vmax.f32 %v310, %v311
        %v313 = vrot.slane %v312, 2
        %v314 = vmax.f32 %v312, %v313
        %v315 = vrot.slane %v314, 1
        %v316 = vmax.f32 %v314, %v315
        %v317 = vsel %vm309, %v307, -inf
        %v318 = vrot.slane %v317, 4
        %v319 = vmax.f32 %v317, %v318
        %v320 = vrot.slane %v319, 2
        %v321 = vmax.f32 %v319, %v320
        %v322 = vrot.slane %v321, 1
        %v323 = vmax.f32 %v321, %v322
        %v326 = vcombine.low %v316, %v323
        %vm328 = vcmp.eq.f32.partialorder %v305, %v326
        %v330 = vunpack.c.l.s4 839922192
        %v331 = vunpack.c.0.s8 %v330
        %v332 = vlaneseq
        %v333 = vshrl.u32 %v332, 7
        %v334 = vsub.s32 %v331, %v333
        %v335 = vrot.slane %v300, %v334
        %v336 = vsel %vm328, %v335, 4
        %v337 = vcombine.high %v336, %v336
        %v338 = vsel %vm309, %v336, 2147483647
        %v339 = vrot.slane %v338, 4
        %vm340 = vcmp.lt.s32.totalorder %v338, %v339
        %v341 = vsel %vm340, %v338, %v339
        %v342 = vrot.slane %v341, 2
        %vm343 = vcmp.lt.s32.totalorder %v341, %v342
        %v344 = vsel %vm343, %v341, %v342
        %v345 = vrot.slane %v344, 1
        %vm346 = vcmp.lt.s32.totalorder %v344, %v345
        %v347 = vsel %vm346, %v344, %v345
        %v348 = vsel %vm309, %v337, 2147483647
        %v349 = vrot.slane %v348, 4
        %vm350 = vcmp.lt.s32.totalorder %v348, %v349
        %v351 = vsel %vm350, %v348, %v349
        %v352 = vrot.slane %v351, 2
        %vm353 = vcmp.lt.s32.totalorder %v351, %v352
        %v354 = vsel %vm353, %v351, %v352
        %v355 = vrot.slane %v354, 1
        %vm356 = vcmp.lt.s32.totalorder %v354, %v355
        %v357 = vsel %vm356, %v354, %v355
        %vm358 = vcmp.eq.s32.totalorder %v300, %v347
        %vm359 = vcmp.eq.s32.totalorder %v300, %v357
        %v361 = vcombine.high %v304, %v304
        %v363 = vsel %vm309, %v304, -inf
        %v364 = vrot.slane %v363, 4
        %v365 = vmax.f32 %v363, %v364
        %v366 = vrot.slane %v365, 2
        %v367 = vmax.f32 %v365, %v366
        %v368 = vrot.slane %v367, 1
        %v369 = vmax.f32 %v367, %v368
        %v370 = vsel %vm309, %v361, -inf
        %v371 = vrot.slane %v370, 4
        %v372 = vmax.f32 %v370, %v371
        %v373 = vrot.slane %v372, 2
        %v374 = vmax.f32 %v372, %v373
        %v375 = vrot.slane %v374, 1
        %v376 = vmax.f32 %v374, %v375
        %v379 = vcombine.low %v369, %v376
        %v381 = vsub.f32 %v304, %v379
        %v382 = vmul.f32 %v381, 1.442695
        %v383 = vpow.pop %v382
        %v385 = vcombine.high %v383, %v383
        %v387 = vsel %vm309, %v383, 0.0
        %v388 = vrot.slane %v387, 4
        %v389 = vadd.f32 %v387, %v388
        %v390 = vrot.slane %v389, 2
        %v391 = vadd.f32 %v389, %v390
        %v392 = vrot.slane %v391, 1
        %v393 = vadd.f32 %v391, %v392
        %v394 = vsel %vm309, %v385, 0.0
        %v395 = vrot.slane %v394, 4
        %v396 = vadd.f32 %v394, %v395
        %v397 = vrot.slane %v396, 2
        %v398 = vadd.f32 %v396, %v397
        %v399 = vrot.slane %v398, 1
        %v400 = vadd.f32 %v398, %v399
        %v401 = vlog2.pop %v393
        %v402 = vmul.f32 %v401, 0.6931472
        %v403 = vlog2.pop %v400
        %v404 = vmul.f32 %v403, 0.6931472
        %v406 = vcombine.high %v381, %v381
        %v408 = vsel %vm358, %v381, 0.0
        %v409 = vsel %vm359, %v406, 0.0
        %v410 = vsel %vm309, %v408, 0.0
        %v411 = vrot.slane %v410, 4
        %v412 = vadd.f32 %v410, %v411
        %v413 = vrot.slane %v412, 2
        %v414 = vadd.f32 %v412, %v413
        %v415 = vrot.slane %v414, 1
        %v416 = vadd.f32 %v414, %v415
        %v417 = vsel %vm309, %v409, 0.0
        %v418 = vrot.slane %v417, 4
        %v419 = vadd.f32 %v417, %v418
        %v420 = vrot.slane %v419, 2
        %v421 = vadd.f32 %v419, %v420
        %v422 = vrot.slane %v421, 1
        %v423 = vadd.f32 %v421, %v422
        %v424 = vsub.f32 %v402, %v416
        %v425 = vsub.f32 %v404, %v423
        %s426 = sadd.s32 %s298, 0
        %v427 = vstv %s426
        %v428 = vadd.s32 %v427, %v302
        %v429 = vadd.s32 %v427, %v303
        %vm430 = vcmp.lt.s32.totalorder %v428, 256
        %vm431 = vcmp.lt.s32.totalorder %v429, 256
        %v432 = vld [vmem:[#allocation2] sm:$0xff]
        %v433 = vmul.f32 %v424, %v305
        %v434 = vmul.f32 %v425, %v307
        %v435 = vsel %vm430, 1, 0
        %v436 = vsel %vm431, 1, 0
        %vm437 = vcmp.eq.s32.totalorder %v435, 1
        %vm438 = vcmp.eq.s32.totalorder %v436, 1
        %v439 = vsel %vm437, %v433, 0.0
        %v440 = vsel %vm438, %v434, 0.0
        %v443 = vcombine.low %v439, %v440
        %v445 = vadd.f32 %v432, %v443
        %446 = vst [vmem:[#allocation2] sm:$0xff] %v445
        %v447 = vld [vmem:[#allocation3] sm:$0xff]
        %v448 = vsel %vm437, %v305, 0.0
        %v449 = vsel %vm438, %v307, 0.0
        %v452 = vcombine.low %v448, %v449
        %v454 = vadd.f32 %v447, %v452
        %455 = vst [vmem:[#allocation3] sm:$0xff] %v454
        // Predicated region
        $region41: #{tpu_custom_call.1} parent=27 // pred_check
          %p456 = pneg %p291
        $region42: #{tpu_custom_call.1} parent=27 // pred_check_branch
          %458 = sbr.rel (%p456) target = $region44
        $region43: #{tpu_custom_call.1} parent=27 // pred_region
          %v459 = vld [vmem:[#allocation2] sm:$0xff]
          %v461 = vcombine.high %v459, %v459
          %v463 = vsel %vm309, %v459, 0.0
          %v464 = vsel %vm309, %v461, 0.0
          %v465 = vadd.f32 %v463, %v464
          %466 = vadd.xlane.f32.xlu0 %v465
          %v467 = vpop.xlane.xlu0 %466
          %v469 = vlaneseq
          %v470 = vshrl.u32 %v469, 7
          %v471 = vsub.s32 %v302, %v470
          %v472 = vrot.slane %v467, %v471
          %vm474 = vcmask 24576
          %475 = vst.msk [vmem:[%s276] sm:$0x1] %vm474, %v472
          %v476 = vld [vmem:[#allocation3] sm:$0xff]
          %v478 = vcombine.high %v476, %v476
          %v480 = vsel %vm309, %v476, 0.0
          %v481 = vsel %vm309, %v478, 0.0
          %v482 = vadd.f32 %v480, %v481
          %483 = vadd.xlane.f32.xlu0 %v482
          %v484 = vpop.xlane.xlu0 %483
          %v486 = vlaneseq
          %v487 = vshrl.u32 %v486, 7
          %v488 = vsub.s32 %v302, %v487
          %v489 = vrot.slane %v484, %v488
          %491 = vst.msk [vmem:[%s282] sm:$0x1] %vm474, %v489
        $region44: #{tpu_custom_call.1} parent=27 // pred_fallthru
          _
        %s492 = sand.u32 %s124, 1
        %s493 = scalar_lea.sflag [#allocation6], %s492
        %s494 = sand.u32 %s124, 1
        %s495 = scalar_lea.vmem [#allocation9], %s494
        %s496 = sand.u32 %s152, 1
        %s497 = scalar_lea.sflag [#allocation11], %s496
        %s498 = sand.u32 %s152, 1
        %s499 = scalar_lea.vmem [#allocation10], %s498
        // Predicated region
        $region45: #{tpu_custom_call.1} parent=27 // pred_check
          %p500 = pneg %p134
        $region46: #{tpu_custom_call.1} parent=27 // pred_check_branch
          %502 = sbr.rel (%p500) target = $region48
        $region47: #{tpu_custom_call.1} parent=27 // pred_region
          %s504 = ssub.s32 16, 16
          %505 = vsyncadd %s493, %s504
          %s506 = sadd.s32 %s33, %s32
          %s507 = smul.addr %s506, 16
          %s508 = scalar_lea.hbm %s2, %s507
          %s510 = sshll.u32 %s495, 4
          %s511 = int_to_ptr.vmem [resolvable:$true] %s510
          %513 = dma.vmem_to_hbm [thread:$0]  %s511, 16, %s508, %s493
        $region48: #{tpu_custom_call.1} parent=27 // pred_fallthru
          _
        // Predicated region
        $region49: #{tpu_custom_call.1} parent=27 // pred_check
          %p514 = pneg %p162
        $region50: #{tpu_custom_call.1} parent=27 // pred_check_branch
          %516 = sbr.rel (%p514) target = $region52
        $region51: #{tpu_custom_call.1} parent=27 // pred_region
          %s518 = ssub.s32 16, 16
          %519 = vsyncadd %s497, %s518
          %s520 = sadd.s32 %s33, %s32
          %s521 = smul.addr %s520, 16
          %s522 = scalar_lea.hbm %s3, %s521
          %s524 = sshll.u32 %s499, 4
          %s525 = int_to_ptr.vmem [resolvable:$true] %s524
          %527 = dma.vmem_to_hbm [thread:$0]  %s525, 16, %s522, %s497
        $region52: #{tpu_custom_call.1} parent=27 // pred_fallthru
          _
      $region28: #{tpu_custom_call.1} parent=5 // pred_fallthru
        _
      %p528 = scmp.le.s32.totalorder 2, %s22
      // Predicated region
      $region53: #{tpu_custom_call.1} parent=5 // pred_check
        %p529 = pneg %p528
      $region54: #{tpu_custom_call.1} parent=5 // pred_check_branch
        %531 = sbr.rel (%p529) target = $region56
      $region55: #{tpu_custom_call.1} parent=5 // pred_region
        %s532 = ssub.s32 %s22, 2
        // Predicated region
        $region57: #{tpu_custom_call.1} parent=55 // pred_check
          %p533 = pneg %p140
        $region58: #{tpu_custom_call.1} parent=55 // pred_check_branch
          %535 = sbr.rel (%p533) target = $region60
        $region59: #{tpu_custom_call.1} parent=55 // pred_region
          %s536 = sand.u32 %s125, 1
          %s537 = scalar_lea.sflag [#allocation6], %s536
          %s538 = sand.u32 %s125, 1
          %s539 = scalar_lea.vmem [#allocation9], %s538
          %540 = dma.done %s537, 16
        $region60: #{tpu_custom_call.1} parent=55 // pred_fallthru
          _
        // Predicated region
        $region61: #{tpu_custom_call.1} parent=55 // pred_check
          %p541 = pneg %p168
        $region62: #{tpu_custom_call.1} parent=55 // pred_check_branch
          %543 = sbr.rel (%p541) target = $region64
        $region63: #{tpu_custom_call.1} parent=55 // pred_region
          %s544 = sand.u32 %s153, 1
          %s545 = scalar_lea.sflag [#allocation11], %s544
          %s546 = sand.u32 %s153, 1
          %s547 = scalar_lea.vmem [#allocation10], %s546
          %548 = dma.done %s545, 16
        $region64: #{tpu_custom_call.1} parent=55 // pred_fallthru
          _
      $region56: #{tpu_custom_call.1} parent=5 // pred_fallthru
        _
    $region6: #{tpu_custom_call.1} parent=1 // loop_footer
      %s26 = sadd.s32 1, %s22
    $region7: #{tpu_custom_call.1} parent=1 // loop_footer_branch
      %21 = sbr.rel target = $region3
    $region8: #{tpu_custom_call.1} parent=1 // loop_exit
      _
    %549 = vsyncpa [#allocation5], 1
    %s550 = scalar_lea.sflag [#allocation5], 1
    %551 = vsyncpa %s550, 1
    %552 = vsyncpa [#allocation8], 1
    %s553 = scalar_lea.sflag [#allocation8], 1
    %554 = vsyncpa %s553, 1
    %555 = vsyncpa [#allocation6], 1
    %s556 = scalar_lea.sflag [#allocation6], 1
    %557 = vsyncpa %s556, 1
    %558 = vsyncpa [#allocation11], 1
    %s559 = scalar_lea.sflag [#allocation11], 1
    %560 = vsyncpa %s559, 1

</llo_original>
